<compile_context>
chip_gen: v6e
topology: v6e:2x2x1
jax: 0.10.0
libtpu: 0.0.40
codegen_flags: <defaults>
</compile_context>

<pallas_src>
import jax
import jax.numpy as jnp
from jax.experimental import pallas as pl
from jax.experimental.pallas import tpu as pltpu


def _round_up(x, m):
    return ((x + m - 1) // m) * m


def sl_network_kernel(x_ref, w1_ref, b1_ref, w2_ref, b2_ref, w3_ref, b3_ref,
                      out_ref):
    """Fused fc1->relu->fc2->relu->fc3->relu on one (TM, in_dim_pad) tile.

      x_ref  : (TM, in_dim_pad)    compute_dtype
      w1_ref : (in_dim_pad, n)     compute_dtype   (pre-transposed, row-padded)
      b1_ref : (1, n)              float32
      w2_ref : (n, j)              compute_dtype
      b2_ref : (1, j)              float32
      w3_ref : (j, out_dim_pad)    compute_dtype   (pre-transposed, col-padded)
      b3_ref : (1, out_dim_pad)    float32
      out_ref: (TM, out_dim_pad)   float32
    """
    x = x_ref[...]

    h1 = jnp.dot(x, w1_ref[...], preferred_element_type=jnp.float32)
    h1 = jnp.maximum(h1 + b1_ref[...], 0.0)

    h2 = jnp.dot(h1.astype(w2_ref.dtype), w2_ref[...],
                 preferred_element_type=jnp.float32)
    h2 = jnp.maximum(h2 + b2_ref[...], 0.0)

    h3 = jnp.dot(h2.astype(w3_ref.dtype), w3_ref[...],
                 preferred_element_type=jnp.float32)
    h3 = jnp.maximum(h3 + b3_ref[...], 0.0)

    out_ref[...] = h3.astype(out_ref.dtype)


def prepare_params(params, compute_dtype=jnp.float32):
    """One-time parameter prep (NOT per forward call).

    Converts PyTorch-layout (out, in) weights to (in, out), reshapes biases
    to (1, out), zero-pads the network's input/output feature dims up to a
    multiple of 128 (lane-dense tiles), and casts weights to compute_dtype.
    Biases stay f32 so the bias-add/ReLU epilogue is pure f32 VPU work.
    """
    w1, b1, w2, b2, w3, b3 = params
    in_dim = w1.shape[1]
    out_dim = w3.shape[0]
    in_dim_pad = _round_up(in_dim, 128)
    out_dim_pad = _round_up(out_dim, 128)

    w1t = jnp.asarray(w1.T, compute_dtype)                       # (in_dim, n)
    w1t = jnp.pad(w1t, ((0, in_dim_pad - in_dim), (0, 0)))       # pad rows
    w3t = jnp.asarray(w3.T, compute_dtype)                       # (j, out_dim)
    w3t = jnp.pad(w3t, ((0, 0), (0, out_dim_pad - out_dim)))     # pad cols
    b3p = jnp.asarray(b3, jnp.float32).reshape(1, -1)
    b3p = jnp.pad(b3p, ((0, 0), (0, out_dim_pad - out_dim)))

    return (
        w1t,
        jnp.asarray(b1, jnp.float32).reshape(1, -1),
        jnp.asarray(w2.T, compute_dtype),
        jnp.asarray(b2, jnp.float32).reshape(1, -1),
        w3t,
        b3p,
    )


def sl_network_forward(x, prepared_params, n, j, k, *, block_batch=None,
                       compute_dtype=jnp.float32):
    """JAX wrapper mirroring SL_Network.forward.

    x: (B, n, k)  ->  output: (B, n, j) float32
    """
    w1, b1, w2, b2, w3, b3 = prepared_params
    B = x.shape[0]
    in_dim = n * k
    out_dim = n * j
    in_dim_pad = w1.shape[0]
    out_dim_pad = w3.shape[1]

    itemsize = jnp.dtype(compute_dtype).itemsize

    # Flatten exactly like torch .view, cast, then zero-pad the feature dim
    # (zero columns hit zero-padded w1 rows -> contribute nothing).
    x_flat = x.reshape(B, in_dim).astype(compute_dtype)
    if in_dim_pad != in_dim:
        x_flat = jnp.pad(x_flat, ((0, 0), (0, in_dim_pad - in_dim)))

    # Batch tile: multiple of 8 (f32 sublane). Size it so resident weights +
    # double-buffered in/out tiles fit comfortably in the default scoped-VMEM
    # budget on all generations (target ~12 MiB of tile memory).
    if block_batch is None:
        per_row_bytes = 2 * in_dim_pad * itemsize + 2 * out_dim_pad * 4
        tm_cap = max(8, (12 * 1024 * 1024 // per_row_bytes) // 8 * 8)
        tm_cap = min(tm_cap, 1024)
        block_batch = max(8, min(tm_cap, _round_up(B, 8)))
    tm = _round_up(block_batch, 8)

    B_pad = _round_up(B, tm)
    if B_pad != B:
        x_flat = jnp.pad(x_flat, ((0, B_pad - B), (0, 0)))

    grid = (B_pad // tm,)

    flops = 2 * B_pad * (in_dim_pad * n + n * j + j * out_dim_pad)
    bytes_accessed = int(
        B_pad * in_dim_pad * itemsize                              # x in
        + (in_dim_pad * n + n * j + j * out_dim_pad) * itemsize    # weights
        + (n + j + out_dim_pad) * 4                                # biases
        + B_pad * out_dim_pad * 4                                  # output
    )

    def _resident(arr):
        # Full-array block; same block index every grid step -> stays in VMEM.
        return pl.BlockSpec(arr.shape, lambda i: (0, 0))

    out_flat = pl.pallas_call(
        sl_network_kernel,
        out_shape=jax.ShapeDtypeStruct((B_pad, out_dim_pad), jnp.float32),
        grid=grid,
        in_specs=[
            pl.BlockSpec((tm, in_dim_pad), lambda i: (i, 0)),  # x: batch-tiled
            _resident(w1), _resident(b1),
            _resident(w2), _resident(b2),
            _resident(w3), _resident(b3),
        ],
        out_specs=pl.BlockSpec((tm, out_dim_pad), lambda i: (i, 0)),
        compiler_params=pltpu.CompilerParams(
            dimension_semantics=("parallel",),
        ),
        cost_estimate=pl.CostEstimate(
            flops=int(flops), transcendentals=0,
            bytes_accessed=bytes_accessed),
    )(x_flat, w1, b1, w2, b2, w3, b3)

    out_flat = out_flat[:B, :out_dim]
    return out_flat.reshape(B, n, j)


def init_params(key, n, j, k):
    """Deterministic nn.Linear-style init (uniform +-1/sqrt(fan_in)),
    in PyTorch (out, in) layout."""
    input_dim = n * k
    keys = jax.random.split(key, 6)

    def linear_init(kw, kb, fan_in, fan_out):
        bound = 1.0 / jnp.sqrt(float(fan_in))
        w = jax.random.uniform(kw, (fan_out, fan_in), jnp.float32,
                               minval=-bound, maxval=bound)
        b = jax.random.uniform(kb, (fan_out,), jnp.float32,
                               minval=-bound, maxval=bound)
        return w, b

    w1, b1 = linear_init(keys[0], keys[1], input_dim, n)     # fc1
    w2, b2 = linear_init(keys[2], keys[3], n, j)             # fc2
    w3, b3 = linear_init(keys[4], keys[5], j, n * j)         # fc3
    return (w1, b1, w2, b2, w3, b3)


if __name__ == "__main__":
    # Small, kernel-friendly shapes: n*k = 128 (lane-aligned), n*j = 128.
    n, j, k = 16, 8, 8
    B = 2

    key = jax.random.PRNGKey(0)
    key_x, key_p = jax.random.split(key)

    x = jax.random.normal(key_x, (B, n, k), dtype=jnp.float32)
    params = init_params(key_p, n, j, k)

    # One-time parameter prep (transpose + bias reshape + lane padding),
    # outside the hot path. For v6e/v7x throughput runs, pass
    # compute_dtype=jnp.bfloat16 here and below to halve HBM read traffic
    # (f32 accumulation is kept in the kernel).
    prepared = prepare_params(params, compute_dtype=jnp.float32)

    out = sl_network_forward(x, prepared, n, j, k,
                             compute_dtype=jnp.float32)
    out = jax.block_until_ready(out)

    # Reference check in plain JAX (same math as the PyTorch forward).
    w1, b1, w2, b2, w3, b3 = params
    xf = x.reshape(B, -1)
    r1 = jnp.maximum(xf @ w1.T + b1, 0.0)
    r2 = jnp.maximum(r1 @ w2.T + b2, 0.0)
    r3 = jnp.maximum(r2 @ w3.T + b3, 0.0)
    ref = r3.reshape(B, n, j)

    assert out.shape == (B, n, j)
    assert jnp.allclose(out, ref, atol=1e-5, rtol=1e-5)

    print("KERNEL_OK")
</pallas_src>

<mosaic_0001>
module attributes {stable_mosaic.version = 11 : i64} {
  func.func @sl_network_kernel(%arg0: i32, %arg1: memref<8x128xf32, #tpu.memory_space<vmem>>, %arg2: memref<128x16xf32, #tpu.memory_space<vmem>>, %arg3: memref<1x16xf32, #tpu.memory_space<vmem>>, %arg4: memref<16x8xf32, #tpu.memory_space<vmem>>, %arg5: memref<1x8xf32, #tpu.memory_space<vmem>>, %arg6: memref<8x128xf32, #tpu.memory_space<vmem>>, %arg7: memref<1x128xf32, #tpu.memory_space<vmem>>, %arg8: memref<8x128xf32, #tpu.memory_space<vmem>>) attributes {dimension_semantics = [#tpu.dimension_semantics<parallel>], iteration_bounds = array<i64: 1>, scalar_prefetch = 0 : i64, scratch_operands = 0 : i64, tpu.core_type = #tpu.core_type<tc>, window_params = [{transform_indices = @transform_0, window_bounds = array<i64: 8, 128>}, {pipeline_mode = #tpu.pipeline_mode<synchronous>, transform_indices = @transform_1, window_bounds = array<i64: 128, 16>}, {pipeline_mode = #tpu.pipeline_mode<synchronous>, transform_indices = @transform_2, window_bounds = array<i64: 1, 16>}, {pipeline_mode = #tpu.pipeline_mode<synchronous>, transform_indices = @transform_3, window_bounds = array<i64: 16, 8>}, {pipeline_mode = #tpu.pipeline_mode<synchronous>, transform_indices = @transform_4, window_bounds = array<i64: 1, 8>}, {pipeline_mode = #tpu.pipeline_mode<synchronous>, transform_indices = @transform_5, window_bounds = array<i64: 8, 128>}, {pipeline_mode = #tpu.pipeline_mode<synchronous>, transform_indices = @transform_6, window_bounds = array<i64: 1, 128>}, {transform_indices = @transform_7, window_bounds = array<i64: 8, 128>}]} {
    %c0 = arith.constant 0 : index
    %c0_0 = arith.constant 0 : index
    %0 = vector.load %arg1[%c0, %c0_0] : memref<8x128xf32, #tpu.memory_space<vmem>>, vector<8x128xf32>
    %c0_1 = arith.constant 0 : index
    %c0_2 = arith.constant 0 : index
    %1 = vector.load %arg2[%c0_1, %c0_2] : memref<128x16xf32, #tpu.memory_space<vmem>>, vector<128x16xf32>
    %cst = arith.constant dense<0.000000e+00> : vector<8x16xf32>
    %2 = tpu.matmul %0, %1, %cst {dimension_numbers = #tpu.dot_dimension_numbers<[1], [0], [0], [1], [0, 0, 1, 1], [], []>} : vector<8x128xf32>, vector<128x16xf32>, vector<8x16xf32> -> vector<8x16xf32>
    %c0_3 = arith.constant 0 : index
    %c0_4 = arith.constant 0 : index
    %3 = vector.load %arg3[%c0_3, %c0_4] : memref<1x16xf32, #tpu.memory_space<vmem>>, vector<1x16xf32>
    %4 = vector.broadcast %3 : vector<1x16xf32> to vector<8x16xf32>
    %5 = arith.addf %2, %4 : vector<8x16xf32>
    %cst_5 = arith.constant 0.000000e+00 : f32
    %6 = vector.broadcast %cst_5 : f32 to vector<8x16xf32>
    %7 = arith.maximumf %5, %6 : vector<8x16xf32>
    %c0_6 = arith.constant 0 : index
    %c0_7 = arith.constant 0 : index
    %8 = vector.load %arg4[%c0_6, %c0_7] : memref<16x8xf32, #tpu.memory_space<vmem>>, vector<16x8xf32>
    %cst_8 = arith.constant dense<0.000000e+00> : vector<8x8xf32>
    %9 = tpu.matmul %7, %8, %cst_8 {dimension_numbers = #tpu.dot_dimension_numbers<[1], [0], [0], [1], [0, 0, 1, 1], [], []>} : vector<8x16xf32>, vector<16x8xf32>, vector<8x8xf32> -> vector<8x8xf32>
    %c0_9 = arith.constant 0 : index
    %c0_10 = arith.constant 0 : index
    %10 = vector.load %arg5[%c0_9, %c0_10] : memref<1x8xf32, #tpu.memory_space<vmem>>, vector<1x8xf32>
    %11 = vector.broadcast %10 : vector<1x8xf32> to vector<8x8xf32>
    %12 = arith.addf %9, %11 : vector<8x8xf32>
    %cst_11 = arith.constant 0.000000e+00 : f32
    %13 = vector.broadcast %cst_11 : f32 to vector<8x8xf32>
    %14 = arith.maximumf %12, %13 : vector<8x8xf32>
    %c0_12 = arith.constant 0 : index
    %c0_13 = arith.constant 0 : index
    %15 = vector.load %arg6[%c0_12, %c0_13] : memref<8x128xf32, #tpu.memory_space<vmem>>, vector<8x128xf32>
    %cst_14 = arith.constant dense<0.000000e+00> : vector<8x128xf32>
    %16 = tpu.matmul %14, %15, %cst_14 {dimension_numbers = #tpu.dot_dimension_numbers<[1], [0], [0], [1], [0, 0, 1, 1], [], []>} : vector<8x8xf32>, vector<8x128xf32>, vector<8x128xf32> -> vector<8x128xf32>
    %c0_15 = arith.constant 0 : index
    %c0_16 = arith.constant 0 : index
    %17 = vector.load %arg7[%c0_15, %c0_16] : memref<1x128xf32, #tpu.memory_space<vmem>>, vector<1x128xf32>
    %18 = vector.broadcast %17 : vector<1x128xf32> to vector<8x128xf32>
    %19 = arith.addf %16, %18 : vector<8x128xf32>
    %cst_17 = arith.constant 0.000000e+00 : f32
    %20 = vector.broadcast %cst_17 : f32 to vector<8x128xf32>
    %21 = arith.maximumf %19, %20 : vector<8x128xf32>
    %c0_18 = arith.constant 0 : index
    %c0_19 = arith.constant 0 : index
    %22 = vector.load %arg8[%c0_18, %c0_19] : memref<8x128xf32, #tpu.memory_space<vmem>>, vector<8x128xf32>
    tpu.vector_store %arg8[%c0_18, %c0_19], %21 {strides = array<i32>} : memref<8x128xf32, #tpu.memory_space<vmem>>, vector<8x128xf32>,
    return
  }
  func.func @transform_0(%arg0: i32) -> (i32, i32) {
    %c0_i32 = arith.constant 0 : i32
    %c0_i32_0 = arith.constant 0 : i32
    return %arg0, %c0_i32 : i32, i32
  }
  func.func @transform_1(%arg0: i32) -> (i32, i32) {
    %c0_i32 = arith.constant 0 : i32
    %c0_i32_0 = arith.constant 0 : i32
    %c0_i32_1 = arith.constant 0 : i32
    return %c0_i32, %c0_i32_0 : i32, i32
  }
  func.func @transform_2(%arg0: i32) -> (i32, i32) {
    %c0_i32 = arith.constant 0 : i32
    %c0_i32_0 = arith.constant 0 : i32
    %c0_i32_1 = arith.constant 0 : i32
    return %c0_i32, %c0_i32_0 : i32, i32
  }
  func.func @transform_3(%arg0: i32) -> (i32, i32) {
    %c0_i32 = arith.constant 0 : i32
    %c0_i32_0 = arith.constant 0 : i32
    %c0_i32_1 = arith.constant 0 : i32
    return %c0_i32, %c0_i32_0 : i32, i32
  }
  func.func @transform_4(%arg0: i32) -> (i32, i32) {
    %c0_i32 = arith.constant 0 : i32
    %c0_i32_0 = arith.constant 0 : i32
    %c0_i32_1 = arith.constant 0 : i32
    return %c0_i32, %c0_i32_0 : i32, i32
  }
  func.func @transform_5(%arg0: i32) -> (i32, i32) {
    %c0_i32 = arith.constant 0 : i32
    %c0_i32_0 = arith.constant 0 : i32
    %c0_i32_1 = arith.constant 0 : i32
    return %c0_i32, %c0_i32_0 : i32, i32
  }
  func.func @transform_6(%arg0: i32) -> (i32, i32) {
    %c0_i32 = arith.constant 0 : i32
    %c0_i32_0 = arith.constant 0 : i32
    %c0_i32_1 = arith.constant 0 : i32
    return %c0_i32, %c0_i32_0 : i32, i32
  }
  func.func @transform_7(%arg0: i32) -> (i32, i32) {
    %c0_i32 = arith.constant 0 : i32
    %c0_i32_0 = arith.constant 0 : i32
    return %arg0, %c0_i32 : i32, i32
  }
}

</mosaic_0001>

<llo_original>
// kernel: tpu_custom_call.1
$region0: #{tpu_custom_call.1}
  #allocation0 [shape = 'u32[]', space=smem, size = 0x4, offset = 0x4, fixed_abs, tag = 'smem constant byte address 0x4 - core index']
  #allocation1 [shape = 'u32[144,128]{1,0:T(1,128)}', space=vmem, size = 0x12000, scoped, tag = 'internal scratch']
  %s0 = inlined_call_operand.vmem [shape: f32[8,128], index: 0, kind: input, shape index: {}]
  %s1 = inlined_call_operand.vmem [shape: f32[128,16], index: 1, kind: input, shape index: {}]
  %s2 = inlined_call_operand.vmem [shape: f32[1,16], index: 2, kind: input, shape index: {}]
  %s3 = inlined_call_operand.vmem [shape: f32[16,8], index: 3, kind: input, shape index: {}]
  %s4 = inlined_call_operand.vmem [shape: f32[1,8], index: 4, kind: input, shape index: {}]
  %s5 = inlined_call_operand.vmem [shape: f32[8,128], index: 5, kind: input, shape index: {}]
  %s6 = inlined_call_operand.vmem [shape: f32[1,128], index: 6, kind: input, shape index: {}]
  %s7 = inlined_call_operand.hbm [shape: f32[8,128], index: 7, kind: output, shape index: {}]
  %s8 = sld [smem:[#allocation0]]
  $region38: #{tpu_custom_call.1} parent=0
    _
  %s10 = ssub.s32 1, %s8
  %s11 = scalar_select 0, %s10, %s8
  $region1: #{tpu_custom_call.1} parent=0
    #allocation2 [shape = 'u8[4096]{0}', space=vmem, size = 0x1000, scoped, tag = 'output window, operand 0, single buffered']
    #allocation3 [shape = 's32[1]{0}', space=sflag, size = 0x4, scoped, tag = 'scoped memory for tpu_custom_call.1']
    %12 = vsyncpa [#allocation3], 0
    // Predicated region
    $region2: #{tpu_custom_call.1} parent=1 // pred_check
      _
    $region3: #{tpu_custom_call.1} parent=1 // pred_check_branch
      %14 = sbr.rel (0) target = $region5
    $region4: #{tpu_custom_call.1} parent=1 // pred_region
      _
    $region5: #{tpu_custom_call.1} parent=1 // pred_fallthru
      _
    // Predicated region
    $region6: #{tpu_custom_call.1} parent=1 // pred_check
      _
    $region7: #{tpu_custom_call.1} parent=1 // pred_check_branch
      %16 = sbr.rel (0) target = $region9
    $region8: #{tpu_custom_call.1} parent=1 // pred_region
      _
    $region9: #{tpu_custom_call.1} parent=1 // pred_fallthru
      _
    // Predicated region
    $region10: #{tpu_custom_call.1} parent=1 // pred_check
      _
    $region11: #{tpu_custom_call.1} parent=1 // pred_check_branch
      %18 = sbr.rel (0) target = $region13
    $region12: #{tpu_custom_call.1} parent=1 // pred_region
      _
    $region13: #{tpu_custom_call.1} parent=1 // pred_fallthru
      _
    // Predicated region
    $region14: #{tpu_custom_call.1} parent=1 // pred_check
      _
    $region15: #{tpu_custom_call.1} parent=1 // pred_check_branch
      %20 = sbr.rel (0) target = $region17
    $region16: #{tpu_custom_call.1} parent=1 // pred_region
      _
    $region17: #{tpu_custom_call.1} parent=1 // pred_fallthru
      _
    // Predicated region
    $region18: #{tpu_custom_call.1} parent=1 // pred_check
      _
    $region19: #{tpu_custom_call.1} parent=1 // pred_check_branch
      %22 = sbr.rel (0) target = $region21
    $region20: #{tpu_custom_call.1} parent=1 // pred_region
      _
    $region21: #{tpu_custom_call.1} parent=1 // pred_fallthru
      _
    // Predicated region
    $region22: #{tpu_custom_call.1} parent=1 // pred_check
      _
    $region23: #{tpu_custom_call.1} parent=1 // pred_check_branch
      %24 = sbr.rel (0) target = $region25
    $region24: #{tpu_custom_call.1} parent=1 // pred_region
      _
    $region25: #{tpu_custom_call.1} parent=1 // pred_fallthru
      _
    // Predicated region
    $region26: #{tpu_custom_call.1} parent=1 // pred_check
      _
    $region27: #{tpu_custom_call.1} parent=1 // pred_check_branch
      %26 = sbr.rel (0) target = $region29
    $region28: #{tpu_custom_call.1} parent=1 // pred_region
      _
    $region29: #{tpu_custom_call.1} parent=1 // pred_fallthru
      _
    %v27 = vld [vmem:[%s0] sm:$0xff]
    %v28 = vld [vmem:[%s1] sm:$0xff]
    %v29 = vld [vmem:[%s1 + $0x8] sm:$0xff]
    %v30 = vld [vmem:[%s1 + $0x10] sm:$0xff]
    %v31 = vld [vmem:[%s1 + $0x18] sm:$0xff]
    %v32 = vld [vmem:[%s1 + $0x20] sm:$0xff]
    %v33 = vld [vmem:[%s1 + $0x28] sm:$0xff]
    %v34 = vld [vmem:[%s1 + $0x30] sm:$0xff]
    %v35 = vld [vmem:[%s1 + $0x38] sm:$0xff]
    %v36 = vld [vmem:[%s1 + $0x40] sm:$0xff]
    %v37 = vld [vmem:[%s1 + $0x48] sm:$0xff]
    %v38 = vld [vmem:[%s1 + $0x50] sm:$0xff]
    %v39 = vld [vmem:[%s1 + $0x58] sm:$0xff]
    %v40 = vld [vmem:[%s1 + $0x60] sm:$0xff]
    %v41 = vld [vmem:[%s1 + $0x68] sm:$0xff]
    %v42 = vld [vmem:[%s1 + $0x70] sm:$0xff]
    %v43 = vld [vmem:[%s1 + $0x78] sm:$0xff]
    %v44 = vld [vmem:[%s2] sm:$0x1]
    %v46 = vlaneseq
    %v47 = vshrl.u32 %v46, 7
    %v48 = vsub.s32 0, %v47
    %v49 = vrot.slane %v44, %v48
    %51 = vmatprep.subr.mxu0 0.0
    %52 = vmatpush1.msra.mxu0 %v43
    %53 = vmatprep.subr.mxu0 0.0
    %54 = vmatpush1.msra.mxu0 %v42
    %55 = vmatprep.subr.mxu0 0.0
    %56 = vmatpush1.msra.mxu0 %v41
    %57 = vmatprep.subr.mxu0 0.0
    %58 = vmatpush1.msra.mxu0 %v40
    %59 = vmatprep.subr.mxu0 0.0
    %60 = vmatpush1.msra.mxu0 %v39
    %61 = vmatprep.subr.mxu0 0.0
    %62 = vmatpush1.msra.mxu0 %v38
    %63 = vmatprep.subr.mxu0 0.0
    %64 = vmatpush1.msra.mxu0 %v37
    %65 = vmatprep.subr.mxu0 0.0
    %66 = vmatpush1.msra.mxu0 %v36
    %67 = vmatprep.subr.mxu0 0.0
    %68 = vmatpush1.msra.mxu0 %v35
    %69 = vmatprep.subr.mxu0 0.0
    %70 = vmatpush1.msra.mxu0 %v34
    %71 = vmatprep.subr.mxu0 0.0
    %72 = vmatpush1.msra.mxu0 %v33
    %73 = vmatprep.subr.mxu0 0.0
    %74 = vmatpush1.msra.mxu0 %v32
    %75 = vmatprep.subr.mxu0 0.0
    %76 = vmatpush1.msra.mxu0 %v31
    %77 = vmatprep.subr.mxu0 0.0
    %78 = vmatpush1.msra.mxu0 %v30
    %79 = vmatprep.subr.mxu0 0.0
    %80 = vmatpush1.msra.mxu0 %v29
    %81 = vmatprep.subr.mxu0 0.0
    %82 = vmatpush1.msra.mxu0 %v28
    %83 = vmatprep.subr.mxu0 0.0
    %84 = vmatpush2.msra.mxu0 0.0
    %85 = vmatprep.subr.mxu0 0.0
    %86 = vmatpush2.msra.mxu0 0.0
    %87 = vmatprep.subr.mxu0 0.0
    %88 = vmatpush2.msra.mxu0 0.0
    %89 = vmatprep.subr.mxu0 0.0
    %90 = vmatpush2.msra.mxu0 0.0
    %91 = vmatprep.subr.mxu0 0.0
    %92 = vmatpush2.msra.mxu0 0.0
    %93 = vmatprep.subr.mxu0 0.0
    %94 = vmatpush2.msra.mxu0 0.0
    %95 = vmatprep.subr.mxu0 0.0
    %96 = vmatpush2.msra.mxu0 0.0
    %97 = vmatprep.subr.mxu0 0.0
    %98 = vmatpush2.msra.mxu0 0.0
    %99 = vmatprep.subr.mxu0 0.0
    %100 = vmatpush2.msra.mxu0 0.0
    %101 = vmatprep.subr.mxu0 0.0
    %102 = vmatpush2.msra.mxu0 0.0
    %103 = vmatprep.subr.mxu0 0.0
    %104 = vmatpush2.msra.mxu0 0.0
    %105 = vmatprep.subr.mxu0 0.0
    %106 = vmatpush2.msra.mxu0 0.0
    %107 = vmatprep.subr.mxu0 0.0
    %108 = vmatpush2.msra.mxu0 0.0
    %109 = vmatprep.subr.mxu0 0.0
    %110 = vmatpush2.msra.mxu0 0.0
    %111 = vmatprep.subr.mxu0 0.0
    %112 = vmatpush2.msra.mxu0 0.0
    %113 = vmatprep.subr.mxu0 0.0
    %114 = vmatpush2.msra.mxu0 0.0
    %115 = vmatprep.mubr.f32.mxu0 0.0
    %116 = vmatmul.mubr.f32.gmra.mxu0 %v27
    %v117 = vpop.f32.mrf.mxu0
    %v118 = vadd.f32 %v49, %v117
    %v119 = vpop.f32.mrf.mxu0
    %120 = vdwg.mxu0
    %v121 = vmax.f32 %v118, 0.0
    %v122 = vld [vmem:[%s3] sm:$0xff]
    %v123 = vld [vmem:[%s3 + $0x8] sm:$0xff]
    %v124 = vld [vmem:[%s4] sm:$0x1]
    %v126 = vlaneseq
    %v127 = vshrl.u32 %v126, 7
    %v128 = vsub.s32 0, %v127
    %v129 = vrot.slane %v124, %v128
    %vm131 = vcmask 130048
    %v133 = vsel %vm131, %v121, 0
    %135 = vmatprep.subr.mxu0 0.0
    %136 = vmatpush1.msra.mxu0 0.0
    %137 = vmatprep.subr.mxu0 0.0
    %138 = vmatpush1.msra.mxu0 0.0
    %139 = vmatprep.subr.mxu0 0.0
    %140 = vmatpush1.msra.mxu0 0.0
    %141 = vmatprep.subr.mxu0 0.0
    %142 = vmatpush1.msra.mxu0 0.0
    %143 = vmatprep.subr.mxu0 0.0
    %144 = vmatpush1.msra.mxu0 0.0
    %145 = vmatprep.subr.mxu0 0.0
    %146 = vmatpush1.msra.mxu0 0.0
    %147 = vmatprep.subr.mxu0 0.0
    %148 = vmatpush1.msra.mxu0 0.0
    %149 = vmatprep.subr.mxu0 0.0
    %150 = vmatpush1.msra.mxu0 0.0
    %151 = vmatprep.subr.mxu0 0.0
    %152 = vmatpush1.msra.mxu0 0.0
    %153 = vmatprep.subr.mxu0 0.0
    %154 = vmatpush1.msra.mxu0 0.0
    %155 = vmatprep.subr.mxu0 0.0
    %156 = vmatpush1.msra.mxu0 0.0
    %157 = vmatprep.subr.mxu0 0.0
    %158 = vmatpush1.msra.mxu0 0.0
    %159 = vmatprep.subr.mxu0 0.0
    %160 = vmatpush1.msra.mxu0 0.0
    %161 = vmatprep.subr.mxu0 0.0
    %162 = vmatpush1.msra.mxu0 0.0
    %163 = vmatprep.subr.mxu0 0.0
    %164 = vmatpush1.msra.mxu0 %v123
    %165 = vmatprep.subr.mxu0 0.0
    %166 = vmatpush1.msra.mxu0 %v122
    %167 = vmatprep.subr.mxu0 0.0
    %168 = vmatpush2.msra.mxu0 0.0
    %169 = vmatprep.subr.mxu0 0.0
    %170 = vmatpush2.msra.mxu0 0.0
    %171 = vmatprep.subr.mxu0 0.0
    %172 = vmatpush2.msra.mxu0 0.0
    %173 = vmatprep.subr.mxu0 0.0
    %174 = vmatpush2.msra.mxu0 0.0
    %175 = vmatprep.subr.mxu0 0.0
    %176 = vmatpush2.msra.mxu0 0.0
    %177 = vmatprep.subr.mxu0 0.0
    %178 = vmatpush2.msra.mxu0 0.0
    %179 = vmatprep.subr.mxu0 0.0
    %180 = vmatpush2.msra.mxu0 0.0
    %181 = vmatprep.subr.mxu0 0.0
    %182 = vmatpush2.msra.mxu0 0.0
    %183 = vmatprep.subr.mxu0 0.0
    %184 = vmatpush2.msra.mxu0 0.0
    %185 = vmatprep.subr.mxu0 0.0
    %186 = vmatpush2.msra.mxu0 0.0
    %187 = vmatprep.subr.mxu0 0.0
    %188 = vmatpush2.msra.mxu0 0.0
    %189 = vmatprep.subr.mxu0 0.0
    %190 = vmatpush2.msra.mxu0 0.0
    %191 = vmatprep.subr.mxu0 0.0
    %192 = vmatpush2.msra.mxu0 0.0
    %193 = vmatprep.subr.mxu0 0.0
    %194 = vmatpush2.msra.mxu0 0.0
    %195 = vmatprep.subr.mxu0 0.0
    %196 = vmatpush2.msra.mxu0 0.0
    %197 = vmatprep.subr.mxu0 0.0
    %198 = vmatpush2.msra.mxu0 0.0
    %199 = vmatprep.mubr.f32.mxu0 0.0
    %200 = vmatmul.mubr.f32.gmra.mxu0 %v133
    %v201 = vpop.f32.mrf.mxu0
    %v202 = vadd.f32 %v129, %v201
    %v203 = vpop.f32.mrf.mxu0
    %204 = vdwg.mxu0
    %v205 = vmax.f32 %v202, 0.0
    %v206 = vld [vmem:[%s5] sm:$0xff]
    %v207 = vld [vmem:[%s6] sm:$0x1]
    %v209 = vlaneseq
    %v210 = vshrl.u32 %v209, 7
    %v211 = vsub.s32 0, %v210
    %v212 = vrot.slane %v207, %v211
    %vm214 = vcmask 64512
    %v216 = vsel %vm214, %v205, 0
    %218 = vmatprep.subr.mxu0 0.0
    %219 = vmatpush1.msra.mxu0 0.0
    %220 = vmatprep.subr.mxu0 0.0
    %221 = vmatpush1.msra.mxu0 0.0
    %222 = vmatprep.subr.mxu0 0.0
    %223 = vmatpush1.msra.mxu0 0.0
    %224 = vmatprep.subr.mxu0 0.0
    %225 = vmatpush1.msra.mxu0 0.0
    %226 = vmatprep.subr.mxu0 0.0
    %227 = vmatpush1.msra.mxu0 0.0
    %228 = vmatprep.subr.mxu0 0.0
    %229 = vmatpush1.msra.mxu0 0.0
    %230 = vmatprep.subr.mxu0 0.0
    %231 = vmatpush1.msra.mxu0 0.0
    %232 = vmatprep.subr.mxu0 0.0
    %233 = vmatpush1.msra.mxu0 0.0
    %234 = vmatprep.subr.mxu0 0.0
    %235 = vmatpush1.msra.mxu0 0.0
    %236 = vmatprep.subr.mxu0 0.0
    %237 = vmatpush1.msra.mxu0 0.0
    %238 = vmatprep.subr.mxu0 0.0
    %239 = vmatpush1.msra.mxu0 0.0
    %240 = vmatprep.subr.mxu0 0.0
    %241 = vmatpush1.msra.mxu0 0.0
    %242 = vmatprep.subr.mxu0 0.0
    %243 = vmatpush1.msra.mxu0 0.0
    %244 = vmatprep.subr.mxu0 0.0
    %245 = vmatpush1.msra.mxu0 0.0
    %246 = vmatprep.subr.mxu0 0.0
    %247 = vmatpush1.msra.mxu0 0.0
    %248 = vmatprep.subr.mxu0 0.0
    %249 = vmatpush1.msra.mxu0 %v206
    %250 = vmatprep.subr.mxu0 0.0
    %251 = vmatpush2.msra.mxu0 0.0
    %252 = vmatprep.subr.mxu0 0.0
    %253 = vmatpush2.msra.mxu0 0.0
    %254 = vmatprep.subr.mxu0 0.0
    %255 = vmatpush2.msra.mxu0 0.0
    %256 = vmatprep.subr.mxu0 0.0
    %257 = vmatpush2.msra.mxu0 0.0
    %258 = vmatprep.subr.mxu0 0.0
    %259 = vmatpush2.msra.mxu0 0.0
    %260 = vmatprep.subr.mxu0 0.0
    %261 = vmatpush2.msra.mxu0 0.0
    %262 = vmatprep.subr.mxu0 0.0
    %263 = vmatpush2.msra.mxu0 0.0
    %264 = vmatprep.subr.mxu0 0.0
    %265 = vmatpush2.msra.mxu0 0.0
    %266 = vmatprep.subr.mxu0 0.0
    %267 = vmatpush2.msra.mxu0 0.0
    %268 = vmatprep.subr.mxu0 0.0
    %269 = vmatpush2.msra.mxu0 0.0
    %270 = vmatprep.subr.mxu0 0.0
    %271 = vmatpush2.msra.mxu0 0.0
    %272 = vmatprep.subr.mxu0 0.0
    %273 = vmatpush2.msra.mxu0 0.0
    %274 = vmatprep.subr.mxu0 0.0
    %275 = vmatpush2.msra.mxu0 0.0
    %276 = vmatprep.subr.mxu0 0.0
    %277 = vmatpush2.msra.mxu0 0.0
    %278 = vmatprep.subr.mxu0 0.0
    %279 = vmatpush2.msra.mxu0 0.0
    %280 = vmatprep.subr.mxu0 0.0
    %281 = vmatpush2.msra.mxu0 0.0
    %282 = vmatprep.mubr.f32.mxu0 0.0
    %283 = vmatmul.mubr.f32.gmra.mxu0 %v216
    %v284 = vpop.f32.mrf.mxu0
    %v285 = vadd.f32 %v212, %v284
    %v286 = vpop.f32.mrf.mxu0
    %287 = vdwg.mxu0
    %v288 = vmax.f32 %v285, 0.0
    %289 = vst [vmem:[#allocation2] sm:$0xff] %v288
    // Predicated region
    $region30: #{tpu_custom_call.1} parent=1 // pred_check
      _
    $region31: #{tpu_custom_call.1} parent=1 // pred_check_branch
      %291 = sbr.rel (0) target = $region33
    $region32: #{tpu_custom_call.1} parent=1 // pred_region
      %s293 = ssub.s32 128, 128
      %294 = vsyncadd [#allocation3], %s293
      %s296 = sshll.u32 [#allocation2], 4
      %s297 = int_to_ptr.vmem [resolvable:$true] %s296
      %299 = dma.vmem_to_hbm [thread:$0]  %s297, 128, %s7, [#allocation3]
    $region33: #{tpu_custom_call.1} parent=1 // pred_fallthru
      _
    // Predicated region
    $region34: #{tpu_custom_call.1} parent=1 // pred_check
      _
    $region35: #{tpu_custom_call.1} parent=1 // pred_check_branch
      %301 = sbr.rel (0) target = $region37
    $region36: #{tpu_custom_call.1} parent=1 // pred_region
      %302 = dma.done [#allocation3], 128
    $region37: #{tpu_custom_call.1} parent=1 // pred_fallthru
      _
    %303 = vsyncpa [#allocation3], 1

</llo_original>
